<compile_context>
chip_gen: v7x
topology: tpu7x:2x2x1
jax: 0.10.0
libtpu: 0.0.40
codegen_flags: <defaults>
</compile_context>

<pallas_src>
import functools

import jax
import jax.numpy as jnp
from jax.experimental import pallas as pl
from jax.experimental.pallas import tpu as pltpu


def _crelu_kernel(x_ref, w_ref, b_ref, o_ref, pad_ref, slab_ref, *,
                  kh, kw, cin, img_h, img_w, wp, pad, l_pad, cdtype):
    # x_ref:    (1, Cin, H, W)   raw image block (auto-pipelined from HBM)
    # w_ref:    (2*Cout, K)      K = kh*kw*Cin; BN scale + CReLU negation folded in
    # b_ref:    (2*Cout, 1)      folded BN shift (and its negation), f32
    # o_ref:    (1, 2*Cout, L_pad)  lane-dense output, L_pad multiple of 128
    # pad_ref:  (Cin, Lp)        zero-padded flat image (compute dtype), VMEM scratch
    # slab_ref: (K, L_pad)       gathered shifted slabs, VMEM scratch

    # 1) Padding exists only in VMEM: zero the flat image, scatter the raw rows.
    pad_ref[...] = jnp.zeros_like(pad_ref)
    for r in range(img_h):                                  # static, unrolled
        off = (r + pad) * wp + pad
        pad_ref[:, pl.ds(off, img_w)] = x_ref[0, :, r, :].astype(cdtype)

    # 2) Gather the kh*kw shifted slabs once (lane rotates off the matmul path).
    for dy in range(kh):
        for dx in range(kw):
            t = dy * kw + dx
            slab_ref[pl.ds(t * cin, cin), :] = pad_ref[:, pl.ds(dy * wp + dx, l_pad)]

    # 3) One fused matmul: K = kh*kw*Cin contraction, f32 accumulation on the MXU.
    y = jnp.dot(w_ref[...], slab_ref[...], preferred_element_type=jnp.float32)
    y = y + b_ref[...]                                      # bias broadcast over lanes
    o_ref[0] = jnp.maximum(y, 0.0).astype(o_ref.dtype)


def crelu_forward(x_nchw, weight, gamma, beta, running_mean, running_var,
                  *, stride=1, padding=1, eps=1e-5,
                  compute_dtype=jnp.bfloat16, out_dtype=None):
    N, C, H, W = x_nchw.shape
    Cout, Cin, kh, kw = weight.shape
    assert Cin == C
    if out_dtype is None:
        out_dtype = x_nchw.dtype

    Hp, Wp = H + 2 * padding, W + 2 * padding
    Ho1, Wo1 = Hp - kh + 1, Wp - kw + 1          # stride-1 output grid (kernel computes this)
    Ho = (Hp - kh) // stride + 1                 # final output grid
    Wo = (Wp - kw) // stride + 1

    L_out = Ho1 * Wp                             # outputs laid out on the padded width
    L_pad = ((L_out + 127) // 128) * 128         # lane-dense: full-lane unmasked stores
    max_off = (kh - 1) * Wp + (kw - 1)           # largest tap lane offset
    Lp = ((max(max_off + L_pad, Hp * Wp) + 127) // 128) * 128
    K = kh * kw * Cin

    # ---- fold eval-mode BN and the CReLU negation into a dense (2*Cout, K) weight ----
    scale = (gamma.astype(jnp.float32) /
             jnp.sqrt(running_var.astype(jnp.float32) + eps))             # (Cout,)
    shift = beta.astype(jnp.float32) - running_mean.astype(jnp.float32) * scale
    w_s = weight.astype(jnp.float32) * scale[:, None, None, None]         # (Cout,Cin,kh,kw)
    w2 = jnp.concatenate([w_s, -w_s], axis=0)                             # (2Cout,Cin,kh,kw)
    w2 = jnp.transpose(w2, (0, 2, 3, 1)).reshape(2 * Cout, K)             # [(dy*kw+dx)*Cin+c]
    w2 = w2.astype(compute_dtype)
    b2 = jnp.concatenate([shift, -shift], axis=0).reshape(2 * Cout, 1)    # (2Cout,1) f32

    kernel = functools.partial(
        _crelu_kernel, kh=kh, kw=kw, cin=Cin, img_h=H, img_w=W,
        wp=Wp, pad=padding, l_pad=L_pad, cdtype=compute_dtype)

    out_flat = pl.pallas_call(
        kernel,
        out_shape=jax.ShapeDtypeStruct((N, 2 * Cout, L_pad), out_dtype),
        grid=(N,),
        in_specs=[
            pl.BlockSpec((1, Cin, H, W), lambda n: (n, 0, 0, 0)),   # raw input, no HBM copy
            pl.BlockSpec((2 * Cout, K), lambda n: (0, 0)),
            pl.BlockSpec((2 * Cout, 1), lambda n: (0, 0)),
        ],
        out_specs=pl.BlockSpec((1, 2 * Cout, L_pad), lambda n: (n, 0, 0)),
        scratch_shapes=[
            pltpu.VMEM((Cin, Lp), compute_dtype),      # zero-padded flat image
            pltpu.VMEM((K, L_pad), compute_dtype),     # gathered tap slabs
        ],
        compiler_params=pltpu.CompilerParams(
            dimension_semantics=("parallel",)),
    )(x_nchw, w2, b2)

    # Wrapper-side assembly: drop lane pad, reshape to rows, subsample for stride,
    # drop the (Wp - Wo1) garbage columns.  All cheap slices/reshapes.
    out = out_flat[:, :, :Ho1 * Wp].reshape(N, 2 * Cout, Ho1, Wp)
    if stride != 1:
        out = out[:, :, ::stride, ::stride]
    out = out[:, :, :Ho, :Wo]
    return out


def crelu_reference(x, weight, gamma, beta, mean, var, *, stride=1, padding=1, eps=1e-5):
    y = jax.lax.conv_general_dilated(
        x, weight, (stride, stride),
        [(padding, padding), (padding, padding)],
        dimension_numbers=("NCHW", "OIHW", "NCHW"))
    scale = gamma / jnp.sqrt(var + eps)
    y = y * scale[None, :, None, None] + (beta - mean * scale)[None, :, None, None]
    y = jnp.concatenate([y, -y], axis=1)
    return jnp.maximum(y, 0.0)


if __name__ == "__main__":
    # Small shapes consistent with the module: N=2, C_in=4, H=W=16,
    # Conv2d(in=4, out=8, kernel_size=3, stride=1, padding=1, bias=False).
    N, Cin, H, W = 2, 4, 16, 16
    Cout, kh, kw = 8, 3, 3

    key = jax.random.PRNGKey(0)
    kx, kw_key = jax.random.split(key)
    x = jax.random.normal(kx, (N, Cin, H, W), dtype=jnp.float32)
    weight = jax.random.normal(kw_key, (Cout, Cin, kh, kw), dtype=jnp.float32) * 0.1

    # Deterministic BatchNorm parameters (inference / running-stats semantics).
    gamma = jnp.linspace(0.5, 1.5, Cout, dtype=jnp.float32)
    beta = jnp.linspace(-0.1, 0.1, Cout, dtype=jnp.float32)
    running_mean = jnp.linspace(-0.2, 0.2, Cout, dtype=jnp.float32)
    running_var = jnp.linspace(0.5, 2.0, Cout, dtype=jnp.float32)
    # TODO(synk): training-mode BatchNorm (batch statistics + running-stat update)
    # is not modeled; this implements eval-mode BN folded into scale/shift.

    # --- stride=1, f32 compute: exactness check ---
    ref1 = crelu_reference(x, weight, gamma, beta, running_mean, running_var,
                           stride=1, padding=1)
    fwd_f32 = jax.jit(functools.partial(crelu_forward, stride=1, padding=1,
                                        compute_dtype=jnp.float32))
    out_f32 = jax.block_until_ready(
        fwd_f32(x, weight, gamma, beta, running_mean, running_var))
    assert out_f32.shape == (N, 2 * Cout, H, W), out_f32.shape
    assert jnp.allclose(out_f32, ref1, atol=1e-4, rtol=1e-4), \
        float(jnp.abs(out_f32 - ref1).max())

    # --- stride=1, default bf16 compute (f32 accumulation on the MXU) ---
    fwd_bf16 = jax.jit(functools.partial(crelu_forward, stride=1, padding=1))
    out_bf16 = jax.block_until_ready(
        fwd_bf16(x, weight, gamma, beta, running_mean, running_var))
    assert out_bf16.shape == (N, 2 * Cout, H, W), out_bf16.shape
    assert jnp.allclose(out_bf16, ref1, atol=5e-2, rtol=5e-2), \
        float(jnp.abs(out_bf16 - ref1).max())

    # --- stride=2 path (wrapper-side subsampling), f32 compute ---
    ref2 = crelu_reference(x, weight, gamma, beta, running_mean, running_var,
                           stride=2, padding=1)
    fwd_s2 = jax.jit(functools.partial(crelu_forward, stride=2, padding=1,
                                       compute_dtype=jnp.float32))
    out_s2 = jax.block_until_ready(
        fwd_s2(x, weight, gamma, beta, running_mean, running_var))
    assert out_s2.shape == ref2.shape, (out_s2.shape, ref2.shape)
    assert jnp.allclose(out_s2, ref2, atol=1e-4, rtol=1e-4), \
        float(jnp.abs(out_s2 - ref2).max())

    print("KERNEL_OK")
</pallas_src>

<mosaic_0001>
module attributes {stable_mosaic.version = 11 : i64} {
  func.func @_crelu_kernel(%arg0: i32, %arg1: memref<1x4x16x16xf32, #tpu.memory_space<vmem>>, %arg2: memref<16x36xf32, #tpu.memory_space<vmem>>, %arg3: memref<16x1xf32, #tpu.memory_space<vmem>>, %arg4: memref<1x16x384xf32, #tpu.memory_space<vmem>>, %arg5: memref<4x512xf32, #tpu.memory_space<vmem>>, %arg6: memref<36x384xf32, #tpu.memory_space<vmem>>) attributes {dimension_semantics = [#tpu.dimension_semantics<parallel>], iteration_bounds = array<i64: 2>, scalar_prefetch = 0 : i64, scratch_operands = 2 : i64, tpu.core_type = #tpu.core_type<tc>, window_params = [{transform_indices = @transform_0, window_bounds = array<i64: 1, 4, 16, 16>}, {pipeline_mode = #tpu.pipeline_mode<synchronous>, transform_indices = @transform_1, window_bounds = array<i64: 16, 36>}, {pipeline_mode = #tpu.pipeline_mode<synchronous>, transform_indices = @transform_2, window_bounds = array<i64: 16, 1>}, {transform_indices = @transform_3, window_bounds = array<i64: 1, 16, 384>}]} {
    %cst = arith.constant 0.000000e+00 : f32
    %0 = vector.broadcast %cst : f32 to vector<4x512xf32>
    %c0 = arith.constant 0 : index
    %c0_0 = arith.constant 0 : index
    %1 = vector.load %arg5[%c0, %c0_0] : memref<4x512xf32, #tpu.memory_space<vmem>>, vector<4x512xf32>
    tpu.vector_store %arg5[%c0, %c0_0], %0 {strides = array<i32>} : memref<4x512xf32, #tpu.memory_space<vmem>>, vector<4x512xf32>,
    %c0_1 = arith.constant 0 : index
    %c0_2 = arith.constant 0 : index
    %c0_3 = arith.constant 0 : index
    %c0_4 = arith.constant 0 : index
    %2 = vector.load %arg1[%c0_1, %c0_2, %c0_3, %c0_4] : memref<1x4x16x16xf32, #tpu.memory_space<vmem>>, vector<1x4x1x16xf32>
    %3 = vector.shape_cast %2 : vector<1x4x1x16xf32> to vector<4x16xf32>
    %c0_5 = arith.constant 0 : index
    %c19 = arith.constant 19 : index
    %4 = vector.load %arg5[%c0_5, %c19] : memref<4x512xf32, #tpu.memory_space<vmem>>, vector<4x16xf32>
    tpu.vector_store %arg5[%c0_5, %c19], %3 {strides = array<i32>} : memref<4x512xf32, #tpu.memory_space<vmem>>, vector<4x16xf32>,
    %c0_6 = arith.constant 0 : index
    %c0_7 = arith.constant 0 : index
    %c1 = arith.constant 1 : index
    %c0_8 = arith.constant 0 : index
    %5 = vector.load %arg1[%c0_6, %c0_7, %c1, %c0_8] : memref<1x4x16x16xf32, #tpu.memory_space<vmem>>, vector<1x4x1x16xf32>
    %6 = vector.shape_cast %5 : vector<1x4x1x16xf32> to vector<4x16xf32>
    %c0_9 = arith.constant 0 : index
    %c37 = arith.constant 37 : index
    %7 = vector.load %arg5[%c0_9, %c37] : memref<4x512xf32, #tpu.memory_space<vmem>>, vector<4x16xf32>
    tpu.vector_store %arg5[%c0_9, %c37], %6 {strides = array<i32>} : memref<4x512xf32, #tpu.memory_space<vmem>>, vector<4x16xf32>,
    %c0_10 = arith.constant 0 : index
    %c0_11 = arith.constant 0 : index
    %c2 = arith.constant 2 : index
    %c0_12 = arith.constant 0 : index
    %8 = vector.load %arg1[%c0_10, %c0_11, %c2, %c0_12] : memref<1x4x16x16xf32, #tpu.memory_space<vmem>>, vector<1x4x1x16xf32>
    %9 = vector.shape_cast %8 : vector<1x4x1x16xf32> to vector<4x16xf32>
    %c0_13 = arith.constant 0 : index
    %c55 = arith.constant 55 : index
    %10 = vector.load %arg5[%c0_13, %c55] : memref<4x512xf32, #tpu.memory_space<vmem>>, vector<4x16xf32>
    tpu.vector_store %arg5[%c0_13, %c55], %9 {strides = array<i32>} : memref<4x512xf32, #tpu.memory_space<vmem>>, vector<4x16xf32>,
    %c0_14 = arith.constant 0 : index
    %c0_15 = arith.constant 0 : index
    %c3 = arith.constant 3 : index
    %c0_16 = arith.constant 0 : index
    %11 = vector.load %arg1[%c0_14, %c0_15, %c3, %c0_16] : memref<1x4x16x16xf32, #tpu.memory_space<vmem>>, vector<1x4x1x16xf32>
    %12 = vector.shape_cast %11 : vector<1x4x1x16xf32> to vector<4x16xf32>
    %c0_17 = arith.constant 0 : index
    %c73 = arith.constant 73 : index
    %13 = vector.load %arg5[%c0_17, %c73] : memref<4x512xf32, #tpu.memory_space<vmem>>, vector<4x16xf32>
    tpu.vector_store %arg5[%c0_17, %c73], %12 {strides = array<i32>} : memref<4x512xf32, #tpu.memory_space<vmem>>, vector<4x16xf32>,
    %c0_18 = arith.constant 0 : index
    %c0_19 = arith.constant 0 : index
    %c4 = arith.constant 4 : index
    %c0_20 = arith.constant 0 : index
    %14 = vector.load %arg1[%c0_18, %c0_19, %c4, %c0_20] : memref<1x4x16x16xf32, #tpu.memory_space<vmem>>, vector<1x4x1x16xf32>
    %15 = vector.shape_cast %14 : vector<1x4x1x16xf32> to vector<4x16xf32>
    %c0_21 = arith.constant 0 : index
    %c91 = arith.constant 91 : index
    %16 = vector.load %arg5[%c0_21, %c91] : memref<4x512xf32, #tpu.memory_space<vmem>>, vector<4x16xf32>
    tpu.vector_store %arg5[%c0_21, %c91], %15 {strides = array<i32>} : memref<4x512xf32, #tpu.memory_space<vmem>>, vector<4x16xf32>,
    %c0_22 = arith.constant 0 : index
    %c0_23 = arith.constant 0 : index
    %c5 = arith.constant 5 : index
    %c0_24 = arith.constant 0 : index
    %17 = vector.load %arg1[%c0_22, %c0_23, %c5, %c0_24] : memref<1x4x16x16xf32, #tpu.memory_space<vmem>>, vector<1x4x1x16xf32>
    %18 = vector.shape_cast %17 : vector<1x4x1x16xf32> to vector<4x16xf32>
    %c0_25 = arith.constant 0 : index
    %c109 = arith.constant 109 : index
    %19 = vector.load %arg5[%c0_25, %c109] : memref<4x512xf32, #tpu.memory_space<vmem>>, vector<4x16xf32>
    tpu.vector_store %arg5[%c0_25, %c109], %18 {strides = array<i32>} : memref<4x512xf32, #tpu.memory_space<vmem>>, vector<4x16xf32>,
    %c0_26 = arith.constant 0 : index
    %c0_27 = arith.constant 0 : index
    %c6 = arith.constant 6 : index
    %c0_28 = arith.constant 0 : index
    %20 = vector.load %arg1[%c0_26, %c0_27, %c6, %c0_28] : memref<1x4x16x16xf32, #tpu.memory_space<vmem>>, vector<1x4x1x16xf32>
    %21 = vector.shape_cast %20 : vector<1x4x1x16xf32> to vector<4x16xf32>
    %c0_29 = arith.constant 0 : index
    %c127 = arith.constant 127 : index
    %22 = vector.load %arg5[%c0_29, %c127] : memref<4x512xf32, #tpu.memory_space<vmem>>, vector<4x16xf32>
    tpu.vector_store %arg5[%c0_29, %c127], %21 {strides = array<i32>} : memref<4x512xf32, #tpu.memory_space<vmem>>, vector<4x16xf32>,
    %c0_30 = arith.constant 0 : index
    %c0_31 = arith.constant 0 : index
    %c7 = arith.constant 7 : index
    %c0_32 = arith.constant 0 : index
    %23 = vector.load %arg1[%c0_30, %c0_31, %c7, %c0_32] : memref<1x4x16x16xf32, #tpu.memory_space<vmem>>, vector<1x4x1x16xf32>
    %24 = vector.shape_cast %23 : vector<1x4x1x16xf32> to vector<4x16xf32>
    %c0_33 = arith.constant 0 : index
    %c145 = arith.constant 145 : index
    %25 = vector.load %arg5[%c0_33, %c145] : memref<4x512xf32, #tpu.memory_space<vmem>>, vector<4x16xf32>
    tpu.vector_store %arg5[%c0_33, %c145], %24 {strides = array<i32>} : memref<4x512xf32, #tpu.memory_space<vmem>>, vector<4x16xf32>,
    %c0_34 = arith.constant 0 : index
    %c0_35 = arith.constant 0 : index
    %c8 = arith.constant 8 : index
    %c0_36 = arith.constant 0 : index
    %26 = vector.load %arg1[%c0_34, %c0_35, %c8, %c0_36] : memref<1x4x16x16xf32, #tpu.memory_space<vmem>>, vector<1x4x1x16xf32>
    %27 = vector.shape_cast %26 : vector<1x4x1x16xf32> to vector<4x16xf32>
    %c0_37 = arith.constant 0 : index
    %c163 = arith.constant 163 : index
    %28 = vector.load %arg5[%c0_37, %c163] : memref<4x512xf32, #tpu.memory_space<vmem>>, vector<4x16xf32>
    tpu.vector_store %arg5[%c0_37, %c163], %27 {strides = array<i32>} : memref<4x512xf32, #tpu.memory_space<vmem>>, vector<4x16xf32>,
    %c0_38 = arith.constant 0 : index
    %c0_39 = arith.constant 0 : index
    %c9 = arith.constant 9 : index
    %c0_40 = arith.constant 0 : index
    %29 = vector.load %arg1[%c0_38, %c0_39, %c9, %c0_40] : memref<1x4x16x16xf32, #tpu.memory_space<vmem>>, vector<1x4x1x16xf32>
    %30 = vector.shape_cast %29 : vector<1x4x1x16xf32> to vector<4x16xf32>
    %c0_41 = arith.constant 0 : index
    %c181 = arith.constant 181 : index
    %31 = vector.load %arg5[%c0_41, %c181] : memref<4x512xf32, #tpu.memory_space<vmem>>, vector<4x16xf32>
    tpu.vector_store %arg5[%c0_41, %c181], %30 {strides = array<i32>} : memref<4x512xf32, #tpu.memory_space<vmem>>, vector<4x16xf32>,
    %c0_42 = arith.constant 0 : index
    %c0_43 = arith.constant 0 : index
    %c10 = arith.constant 10 : index
    %c0_44 = arith.constant 0 : index
    %32 = vector.load %arg1[%c0_42, %c0_43, %c10, %c0_44] : memref<1x4x16x16xf32, #tpu.memory_space<vmem>>, vector<1x4x1x16xf32>
    %33 = vector.shape_cast %32 : vector<1x4x1x16xf32> to vector<4x16xf32>
    %c0_45 = arith.constant 0 : index
    %c199 = arith.constant 199 : index
    %34 = vector.load %arg5[%c0_45, %c199] : memref<4x512xf32, #tpu.memory_space<vmem>>, vector<4x16xf32>
    tpu.vector_store %arg5[%c0_45, %c199], %33 {strides = array<i32>} : memref<4x512xf32, #tpu.memory_space<vmem>>, vector<4x16xf32>,
    %c0_46 = arith.constant 0 : index
    %c0_47 = arith.constant 0 : index
    %c11 = arith.constant 11 : index
    %c0_48 = arith.constant 0 : index
    %35 = vector.load %arg1[%c0_46, %c0_47, %c11, %c0_48] : memref<1x4x16x16xf32, #tpu.memory_space<vmem>>, vector<1x4x1x16xf32>
    %36 = vector.shape_cast %35 : vector<1x4x1x16xf32> to vector<4x16xf32>
    %c0_49 = arith.constant 0 : index
    %c217 = arith.constant 217 : index
    %37 = vector.load %arg5[%c0_49, %c217] : memref<4x512xf32, #tpu.memory_space<vmem>>, vector<4x16xf32>
    tpu.vector_store %arg5[%c0_49, %c217], %36 {strides = array<i32>} : memref<4x512xf32, #tpu.memory_space<vmem>>, vector<4x16xf32>,
    %c0_50 = arith.constant 0 : index
    %c0_51 = arith.constant 0 : index
    %c12 = arith.constant 12 : index
    %c0_52 = arith.constant 0 : index
    %38 = vector.load %arg1[%c0_50, %c0_51, %c12, %c0_52] : memref<1x4x16x16xf32, #tpu.memory_space<vmem>>, vector<1x4x1x16xf32>
    %39 = vector.shape_cast %38 : vector<1x4x1x16xf32> to vector<4x16xf32>
    %c0_53 = arith.constant 0 : index
    %c235 = arith.constant 235 : index
    %40 = vector.load %arg5[%c0_53, %c235] : memref<4x512xf32, #tpu.memory_space<vmem>>, vector<4x16xf32>
    tpu.vector_store %arg5[%c0_53, %c235], %39 {strides = array<i32>} : memref<4x512xf32, #tpu.memory_space<vmem>>, vector<4x16xf32>,
    %c0_54 = arith.constant 0 : index
    %c0_55 = arith.constant 0 : index
    %c13 = arith.constant 13 : index
    %c0_56 = arith.constant 0 : index
    %41 = vector.load %arg1[%c0_54, %c0_55, %c13, %c0_56] : memref<1x4x16x16xf32, #tpu.memory_space<vmem>>, vector<1x4x1x16xf32>
    %42 = vector.shape_cast %41 : vector<1x4x1x16xf32> to vector<4x16xf32>
    %c0_57 = arith.constant 0 : index
    %c253 = arith.constant 253 : index
    %43 = vector.load %arg5[%c0_57, %c253] : memref<4x512xf32, #tpu.memory_space<vmem>>, vector<4x16xf32>
    tpu.vector_store %arg5[%c0_57, %c253], %42 {strides = array<i32>} : memref<4x512xf32, #tpu.memory_space<vmem>>, vector<4x16xf32>,
    %c0_58 = arith.constant 0 : index
    %c0_59 = arith.constant 0 : index
    %c14 = arith.constant 14 : index
    %c0_60 = arith.constant 0 : index
    %44 = vector.load %arg1[%c0_58, %c0_59, %c14, %c0_60] : memref<1x4x16x16xf32, #tpu.memory_space<vmem>>, vector<1x4x1x16xf32>
    %45 = vector.shape_cast %44 : vector<1x4x1x16xf32> to vector<4x16xf32>
    %c0_61 = arith.constant 0 : index
    %c271 = arith.constant 271 : index
    %46 = vector.load %arg5[%c0_61, %c271] : memref<4x512xf32, #tpu.memory_space<vmem>>, vector<4x16xf32>
    tpu.vector_store %arg5[%c0_61, %c271], %45 {strides = array<i32>} : memref<4x512xf32, #tpu.memory_space<vmem>>, vector<4x16xf32>,
    %c0_62 = arith.constant 0 : index
    %c0_63 = arith.constant 0 : index
    %c15 = arith.constant 15 : index
    %c0_64 = arith.constant 0 : index
    %47 = vector.load %arg1[%c0_62, %c0_63, %c15, %c0_64] : memref<1x4x16x16xf32, #tpu.memory_space<vmem>>, vector<1x4x1x16xf32>
    %48 = vector.shape_cast %47 : vector<1x4x1x16xf32> to vector<4x16xf32>
    %c0_65 = arith.constant 0 : index
    %c289 = arith.constant 289 : index
    %49 = vector.load %arg5[%c0_65, %c289] : memref<4x512xf32, #tpu.memory_space<vmem>>, vector<4x16xf32>
    tpu.vector_store %arg5[%c0_65, %c289], %48 {strides = array<i32>} : memref<4x512xf32, #tpu.memory_space<vmem>>, vector<4x16xf32>,
    %c0_66 = arith.constant 0 : index
    %c0_67 = arith.constant 0 : index
    %50 = vector.load %arg5[%c0_66, %c0_67] : memref<4x512xf32, #tpu.memory_space<vmem>>, vector<4x384xf32>
    %c0_68 = arith.constant 0 : index
    %c0_69 = arith.constant 0 : index
    %51 = vector.load %arg6[%c0_68, %c0_69] : memref<36x384xf32, #tpu.memory_space<vmem>>, vector<4x384xf32>
    tpu.vector_store %arg6[%c0_68, %c0_69], %50 {strides = array<i32>} : memref<36x384xf32, #tpu.memory_space<vmem>>, vector<4x384xf32>,
    %c0_70 = arith.constant 0 : index
    %c1_71 = arith.constant 1 : index
    %52 = vector.load %arg5[%c0_70, %c1_71] : memref<4x512xf32, #tpu.memory_space<vmem>>, vector<4x384xf32>
    %c4_72 = arith.constant 4 : index
    %c0_73 = arith.constant 0 : index
    %53 = vector.load %arg6[%c4_72, %c0_73] : memref<36x384xf32, #tpu.memory_space<vmem>>, vector<4x384xf32>
    tpu.vector_store %arg6[%c4_72, %c0_73], %52 {strides = array<i32>} : memref<36x384xf32, #tpu.memory_space<vmem>>, vector<4x384xf32>,
    %c0_74 = arith.constant 0 : index
    %c2_75 = arith.constant 2 : index
    %54 = vector.load %arg5[%c0_74, %c2_75] : memref<4x512xf32, #tpu.memory_space<vmem>>, vector<4x384xf32>
    %c8_76 = arith.constant 8 : index
    %c0_77 = arith.constant 0 : index
    %55 = vector.load %arg6[%c8_76, %c0_77] : memref<36x384xf32, #tpu.memory_space<vmem>>, vector<4x384xf32>
    tpu.vector_store %arg6[%c8_76, %c0_77], %54 {strides = array<i32>} : memref<36x384xf32, #tpu.memory_space<vmem>>, vector<4x384xf32>,
    %c0_78 = arith.constant 0 : index
    %c18 = arith.constant 18 : index
    %56 = vector.load %arg5[%c0_78, %c18] : memref<4x512xf32, #tpu.memory_space<vmem>>, vector<4x384xf32>
    %c12_79 = arith.constant 12 : index
    %c0_80 = arith.constant 0 : index
    %57 = vector.load %arg6[%c12_79, %c0_80] : memref<36x384xf32, #tpu.memory_space<vmem>>, vector<4x384xf32>
    tpu.vector_store %arg6[%c12_79, %c0_80], %56 {strides = array<i32>} : memref<36x384xf32, #tpu.memory_space<vmem>>, vector<4x384xf32>,
    %c0_81 = arith.constant 0 : index
    %c19_82 = arith.constant 19 : index
    %58 = vector.load %arg5[%c0_81, %c19_82] : memref<4x512xf32, #tpu.memory_space<vmem>>, vector<4x384xf32>
    %c16 = arith.constant 16 : index
    %c0_83 = arith.constant 0 : index
    %59 = vector.load %arg6[%c16, %c0_83] : memref<36x384xf32, #tpu.memory_space<vmem>>, vector<4x384xf32>
    tpu.vector_store %arg6[%c16, %c0_83], %58 {strides = array<i32>} : memref<36x384xf32, #tpu.memory_space<vmem>>, vector<4x384xf32>,
    %c0_84 = arith.constant 0 : index
    %c20 = arith.constant 20 : index
    %60 = vector.load %arg5[%c0_84, %c20] : memref<4x512xf32, #tpu.memory_space<vmem>>, vector<4x384xf32>
    %c20_85 = arith.constant 20 : index
    %c0_86 = arith.constant 0 : index
    %61 = vector.load %arg6[%c20_85, %c0_86] : memref<36x384xf32, #tpu.memory_space<vmem>>, vector<4x384xf32>
    tpu.vector_store %arg6[%c20_85, %c0_86], %60 {strides = array<i32>} : memref<36x384xf32, #tpu.memory_space<vmem>>, vector<4x384xf32>,
    %c0_87 = arith.constant 0 : index
    %c36 = arith.constant 36 : index
    %62 = vector.load %arg5[%c0_87, %c36] : memref<4x512xf32, #tpu.memory_space<vmem>>, vector<4x384xf32>
    %c24 = arith.constant 24 : index
    %c0_88 = arith.constant 0 : index
    %63 = vector.load %arg6[%c24, %c0_88] : memref<36x384xf32, #tpu.memory_space<vmem>>, vector<4x384xf32>
    tpu.vector_store %arg6[%c24, %c0_88], %62 {strides = array<i32>} : memref<36x384xf32, #tpu.memory_space<vmem>>, vector<4x384xf32>,
    %c0_89 = arith.constant 0 : index
    %c37_90 = arith.constant 37 : index
    %64 = vector.load %arg5[%c0_89, %c37_90] : memref<4x512xf32, #tpu.memory_space<vmem>>, vector<4x384xf32>
    %c28 = arith.constant 28 : index
    %c0_91 = arith.constant 0 : index
    %65 = vector.load %arg6[%c28, %c0_91] : memref<36x384xf32, #tpu.memory_space<vmem>>, vector<4x384xf32>
    tpu.vector_store %arg6[%c28, %c0_91], %64 {strides = array<i32>} : memref<36x384xf32, #tpu.memory_space<vmem>>, vector<4x384xf32>,
    %c0_92 = arith.constant 0 : index
    %c38 = arith.constant 38 : index
    %66 = vector.load %arg5[%c0_92, %c38] : memref<4x512xf32, #tpu.memory_space<vmem>>, vector<4x384xf32>
    %c32 = arith.constant 32 : index
    %c0_93 = arith.constant 0 : index
    %67 = vector.load %arg6[%c32, %c0_93] : memref<36x384xf32, #tpu.memory_space<vmem>>, vector<4x384xf32>
    tpu.vector_store %arg6[%c32, %c0_93], %66 {strides = array<i32>} : memref<36x384xf32, #tpu.memory_space<vmem>>, vector<4x384xf32>,
    %c0_94 = arith.constant 0 : index
    %c0_95 = arith.constant 0 : index
    %68 = vector.load %arg2[%c0_94, %c0_95] : memref<16x36xf32, #tpu.memory_space<vmem>>, vector<16x36xf32>
    %c0_96 = arith.constant 0 : index
    %c0_97 = arith.constant 0 : index
    %69 = vector.load %arg6[%c0_96, %c0_97] : memref<36x384xf32, #tpu.memory_space<vmem>>, vector<36x384xf32>
    %cst_98 = arith.constant dense<0.000000e+00> : vector<16x384xf32>
    %70 = tpu.matmul %68, %69, %cst_98 {dimension_numbers = #tpu.dot_dimension_numbers<[1], [0], [0], [1], [0, 0, 1, 1], [], []>} : vector<16x36xf32>, vector<36x384xf32>, vector<16x384xf32> -> vector<16x384xf32>
    %c0_99 = arith.constant 0 : index
    %c0_100 = arith.constant 0 : index
    %71 = vector.load %arg3[%c0_99, %c0_100] : memref<16x1xf32, #tpu.memory_space<vmem>>, vector<16x1xf32>
    %72 = vector.broadcast %71 : vector<16x1xf32> to vector<16x384xf32>
    %73 = arith.addf %70, %72 : vector<16x384xf32>
    %cst_101 = arith.constant 0.000000e+00 : f32
    %74 = vector.broadcast %cst_101 : f32 to vector<16x384xf32>
    %75 = arith.maximumf %73, %74 : vector<16x384xf32>
    %c0_102 = arith.constant 0 : index
    %c0_103 = arith.constant 0 : index
    %c0_104 = arith.constant 0 : index
    %76 = vector.load %arg4[%c0_102, %c0_103, %c0_104] : memref<1x16x384xf32, #tpu.memory_space<vmem>>, vector<1x16x384xf32>
    %77 = vector.shape_cast %76 : vector<1x16x384xf32> to vector<16x384xf32>
    %78 = vector.shape_cast %75 : vector<16x384xf32> to vector<1x16x384xf32>
    tpu.vector_store %arg4[%c0_102, %c0_103, %c0_104], %78 {strides = array<i32>} : memref<1x16x384xf32, #tpu.memory_space<vmem>>, vector<1x16x384xf32>,
    return
  }
  func.func @transform_0(%arg0: i32) -> (i32, i32, i32, i32) {
    %c0_i32 = arith.constant 0 : i32
    %c0_i32_0 = arith.constant 0 : i32
    %c0_i32_1 = arith.constant 0 : i32
    %c0_i32_2 = arith.constant 0 : i32
    return %arg0, %c0_i32, %c0_i32_0, %c0_i32_1 : i32, i32, i32, i32
  }
  func.func @transform_1(%arg0: i32) -> (i32, i32) {
    %c0_i32 = arith.constant 0 : i32
    %c0_i32_0 = arith.constant 0 : i32
    %c0_i32_1 = arith.constant 0 : i32
    return %c0_i32, %c0_i32_0 : i32, i32
  }
  func.func @transform_2(%arg0: i32) -> (i32, i32) {
    %c0_i32 = arith.constant 0 : i32
    %c0_i32_0 = arith.constant 0 : i32
    %c0_i32_1 = arith.constant 0 : i32
    return %c0_i32, %c0_i32_0 : i32, i32
  }
  func.func @transform_3(%arg0: i32) -> (i32, i32, i32) {
    %c0_i32 = arith.constant 0 : i32
    %c0_i32_0 = arith.constant 0 : i32
    %c0_i32_1 = arith.constant 0 : i32
    return %arg0, %c0_i32, %c0_i32_0 : i32, i32, i32
  }
}

</mosaic_0001>

<llo_original>
// kernel: crelu_forward.1
$region0: #{crelu_forward.1}
  #allocation0 [shape = 'u32[]', space=smem, size = 0x4, offset = 0x4, fixed_abs, tag = 'smem constant byte address 0x4 - core index']
  #allocation1 [shape = 'u32[144,128]{1,0:T(1,128)}', space=vmem, size = 0x12000, scoped, tag = 'internal scratch']
  #allocation2 [shape = 'f32[4,512]{1,0:T(4,128)}', space=vmem, size = 0x2000, scoped, tag = 'scratch operand']
  #allocation3 [shape = 'f32[36,384]{1,0:T(8,128)}', space=vmem, size = 0xf000, scoped, tag = 'scratch operand']
  %s0 = inlined_call_operand.vmem [shape: f32[2,4,16,16], index: 0, kind: input, shape index: {}]
  %s1 = inlined_call_operand.vmem [shape: f32[16,36], index: 1, kind: input, shape index: {}]
  %s2 = inlined_call_operand.vmem [shape: f32[16,1], index: 2, kind: input, shape index: {}]
  %s3 = inlined_call_operand.vmem [shape: f32[2,16,384], index: 3, kind: output, shape index: {}]
  %s4 = sld [smem:[#allocation0]]
  $region45: #{crelu_forward.1} parent=0
    _
  %s6 = ssub.s32 1, %s4
  %s7 = scalar_select 0, %s6, %s4
  loop: start=0, step=1, limit=4
  $region2: #{crelu_forward.1} parent=0 // loop_pre_header
    _
  $region3: #{crelu_forward.1} parent=0 // loop_header
    %s9 = sphi 0, %s13
    %p10 = scmp.ge.s32.totalorder %s9, 4
    %s19 = sphi 0, %s21
    %s22 = sphi 0, %s19
    %s23 = sphi 0, %s22
    %s39 = sphi 0, %s23
    %s43 = sphi 0, %s43
    %s45 = sphi 0, %s43
    %s46 = sphi 0, %s45
    %s60 = sphi 0, %s46
    %s64 = sphi 0, %s64
    %s66 = sphi 0, %s64
    %s67 = sphi 0, %s66
    %s81 = sphi 0, %s67
    %s87 = sphi 0, %s89
    %s90 = sphi 0, %s87
    %s91 = sphi 0, %s90
    %s107 = sphi 0, %s91
  $region4: #{crelu_forward.1} parent=0 // loop_header_branch
    %12 = sbr.rel (%p10) target = $region8
  $region5: #{crelu_forward.1} parent=0 // loop_body
    %s14 = ssub.s32 %s9, 1
    %s15 = ssub.s32 %s9, 2
    %s16 = sadd.s32 %s9, 1
    %s17 = ssub.s32 %s9, %s16
    %p18 = scmp.eq.s32.totalorder %s17, 0
    %s20 = sadd.s32 %s19, 1
    %s21 = scalar_select %p18, %s19, %s20
    %p24 = pneg %p18
    %p25 = scmp.eq.s32.totalorder %s9, 1
    %p26 = por %p24, %p25
    %p27 = scmp.ne.s32.totalorder %s19, %s22
    %p28 = scmp.eq.s32.totalorder %s9, 0
    %p29 = por %p27, %p28
    %p30 = scmp.ne.s32.totalorder %s19, %s22
    %p31 = scmp.eq.s32.totalorder %s14, 1
    %p32 = por %p30, %p31
    %p33 = scmp.ne.s32.totalorder %s22, %s23
    %p34 = scmp.eq.s32.totalorder %s14, 0
    %p35 = por %p33, %p34
    %p36 = scmp.ne.s32.totalorder %s22, %s23
    %p37 = scmp.eq.s32.totalorder %s15, 1
    %p38 = por %p36, %p37
    %p40 = scmp.ne.s32.totalorder %s23, %s39
    %p41 = scmp.eq.s32.totalorder %s15, 0
    %p42 = por %p40, %p41
    %s44 = sadd.s32 %s43, 1
    %p47 = scmp.eq.s32.totalorder %s9, 1
    %p48 = scmp.ne.s32.totalorder %s43, %s45
    %p49 = scmp.eq.s32.totalorder %s9, 0
    %p50 = por %p48, %p49
    %p51 = scmp.ne.s32.totalorder %s43, %s45
    %p52 = scmp.eq.s32.totalorder %s14, 1
    %p53 = por %p51, %p52
    %p54 = scmp.ne.s32.totalorder %s45, %s46
    %p55 = scmp.eq.s32.totalorder %s14, 0
    %p56 = por %p54, %p55
    %p57 = scmp.ne.s32.totalorder %s45, %s46
    %p58 = scmp.eq.s32.totalorder %s15, 1
    %p59 = por %p57, %p58
    %p61 = scmp.ne.s32.totalorder %s46, %s60
    %p62 = scmp.eq.s32.totalorder %s15, 0
    %p63 = por %p61, %p62
    %s65 = sadd.s32 %s64, 1
    %p68 = scmp.eq.s32.totalorder %s9, 1
    %p69 = scmp.ne.s32.totalorder %s64, %s66
    %p70 = scmp.eq.s32.totalorder %s9, 0
    %p71 = por %p69, %p70
    %p72 = scmp.ne.s32.totalorder %s64, %s66
    %p73 = scmp.eq.s32.totalorder %s14, 1
    %p74 = por %p72, %p73
    %p75 = scmp.ne.s32.totalorder %s66, %s67
    %p76 = scmp.eq.s32.totalorder %s14, 0
    %p77 = por %p75, %p76
    %p78 = scmp.ne.s32.totalorder %s66, %s67
    %p79 = scmp.eq.s32.totalorder %s15, 1
    %p80 = por %p78, %p79
    %p82 = scmp.ne.s32.totalorder %s67, %s81
    %p83 = scmp.eq.s32.totalorder %s15, 0
    %p84 = por %p82, %p83
    %s85 = ssub.s32 %s9, %s16
    %p86 = scmp.eq.s32.totalorder %s85, 0
    %s88 = sadd.s32 %s87, 1
    %s89 = scalar_select %p86, %s87, %s88
    %p92 = pneg %p86
    %p93 = scmp.eq.s32.totalorder %s9, 1
    %p94 = por %p92, %p93
    %p95 = scmp.ne.s32.totalorder %s87, %s90
    %p96 = scmp.eq.s32.totalorder %s9, 0
    %p97 = por %p95, %p96
    %p98 = scmp.ne.s32.totalorder %s87, %s90
    %p99 = scmp.eq.s32.totalorder %s14, 1
    %p100 = por %p98, %p99
    %p101 = scmp.ne.s32.totalorder %s90, %s91
    %p102 = scmp.eq.s32.totalorder %s14, 0
    %p103 = por %p101, %p102
    %p104 = scmp.ne.s32.totalorder %s90, %s91
    %p105 = scmp.eq.s32.totalorder %s15, 1
    %p106 = por %p104, %p105
    %p108 = scmp.ne.s32.totalorder %s91, %s107
    %p109 = scmp.eq.s32.totalorder %s15, 0
    %p110 = por %p108, %p109
    %p111 = scmp.le.s32.totalorder 1, %s9
    %p112 = scmp.lt.s32.totalorder %s9, 3
    %p113 = pnand %p111, %p112
    %p114 = pneg %p113
    // Predicated region
    $region9: #{crelu_forward.1} parent=5 // pred_check
      _
    $region10: #{crelu_forward.1} parent=5 // pred_check_branch
      %116 = sbr.rel (%p113) target = $region12
    $region11: #{crelu_forward.1} parent=5 // pred_region
      %s117 = ssub.s32 %s9, 1
      // Predicated region
      $region13: #{crelu_forward.1} parent=11 // pred_check
        %p118 = pneg %p56
      $region14: #{crelu_forward.1} parent=11 // pred_check_branch
        %120 = sbr.rel (%p118) target = $region16
      $region15: #{crelu_forward.1} parent=11 // pred_region
        _
      $region16: #{crelu_forward.1} parent=11 // pred_fallthru
        _
      // Predicated region
      $region17: #{crelu_forward.1} parent=11 // pred_check
        %p121 = pneg %p77
      $region18: #{crelu_forward.1} parent=11 // pred_check_branch
        %123 = sbr.rel (%p121) target = $region20
      $region19: #{crelu_forward.1} parent=11 // pred_region
        _
      $region20: #{crelu_forward.1} parent=11 // pred_fallthru
        _
    $region12: #{crelu_forward.1} parent=5 // pred_fallthru
      _
    %p124 = scmp.lt.s32.totalorder %s9, 2
    // Predicated region
    $region21: #{crelu_forward.1} parent=5 // pred_check
      %p125 = pneg %p124
    $region22: #{crelu_forward.1} parent=5 // pred_check_branch
      %127 = sbr.rel (%p125) target = $region24
    $region23: #{crelu_forward.1} parent=5 // pred_region
      // Predicated region
      $region25: #{crelu_forward.1} parent=23 // pred_check
        %p128 = pneg %p29
      $region26: #{crelu_forward.1} parent=23 // pred_check_branch
        %130 = sbr.rel (%p128) target = $region28
      $region27: #{crelu_forward.1} parent=23 // pred_region
        %p131 = scmp.lt.s32.totalorder %s9, 1
        %s132 = scalar_select %p131, %s9, 1
        %s133 = smul.addr %s132, 8
        %s134 = smul.addr %s133, 8
        %s135 = scalar_lea.vmem %s0, %s134
      $region28: #{crelu_forward.1} parent=23 // pred_fallthru
        _
    $region24: #{crelu_forward.1} parent=5 // pred_fallthru
      _
    %p136 = scmp.le.s32.totalorder 1, %s9
    %p137 = scmp.lt.s32.totalorder %s9, 3
    %p138 = pnand %p136, %p137
    %p139 = pneg %p138
    // Predicated region
    $region29: #{crelu_forward.1} parent=5 // pred_check
      _
    $region30: #{crelu_forward.1} parent=5 // pred_check_branch
      %141 = sbr.rel (%p138) target = $region32
    $region31: #{crelu_forward.1} parent=5 // pred_region
      %s142 = ssub.s32 %s9, 1
      %p143 = scmp.lt.s32.totalorder %s14, 1
      %s144 = scalar_select %p143, %s14, 1
      %s145 = smul.addr %s144, 8
      %s146 = smul.addr %s145, 8
      %s147 = scalar_lea.vmem %s0, %s146
      %p148 = pneg %p35
      %p149 = pneg %p32
      %p150 = pneg %p56
      %p151 = pneg %p53
      %p152 = pneg %p77
      %p153 = pneg %p74
      %p154 = pneg %p103
      %p155 = pneg %p100
      %p156 = scmp.lt.s32.totalorder %s14, 1
      %s157 = scalar_select %p156, %s14, 1
      %s158 = smul.addr %s157, 6
      %s159 = smul.addr %s158, 8
      %s160 = scalar_lea.vmem %s3, %s159
      %p161 = scmp.lt.s32.totalorder %s14, 1
      %s162 = scalar_select %p161, %s14, 1
      %s163 = smul.addr %s162, 8
      %s164 = smul.addr %s163, 8
      %s165 = scalar_lea.vmem %s0, %s164
      %p166 = scmp.lt.s32.totalorder %s14, 1
      %s167 = scalar_select %p166, %s14, 1
      %s168 = smul.addr %s167, 6
      %s169 = smul.addr %s168, 8
      %s170 = scalar_lea.vmem %s3, %s169
      %171 = vst [vmem:[#allocation2] sm:$0xff] 0.0
      %172 = vst [vmem:[#allocation2 + $0x8] sm:$0xff] 0.0
      %v173 = vld [vmem:[%s165] sm:$0x1]
      %v174 = vld [vmem:[%s165 + $0x10] sm:$0x1]
      %v175 = vld [vmem:[%s165 + $0x20] sm:$0x1]
      %v176 = vld [vmem:[%s165 + $0x30] sm:$0x1]
      %v181 = vrot.slane %v174, 7
      %vm182 = vcmask 1041409
      %v183 = vsel %vm182, %v181, %v173
      %vm184 = vcmask 1045509
      %v185 = vsel %vm184, %v181, %v183
      %v186 = vrot.slane %v175, 6
      %vm187 = vcmask 1042434
      %v188 = vsel %vm187, %v186, %v185
      %vm189 = vcmask 1046534
      %v190 = vsel %vm189, %v186, %v188
      %v191 = vrot.slane %v176, 5
      %vm192 = vcmask 1043459
      %v193 = vsel %vm192, %v191, %v190
      %vm194 = vcmask 1047559
      %v195 = vsel %vm194, %v191, %v193
      %196 = vrot.lane.b32.xlu0 %v195, 19
      %v197 = vpop.permute.xlu0 %196
      %vm199 = vcmask 281752
      %200 = vst.msk [vmem:[#allocation2] sm:$0xf] %vm199, %v197
      %v201 = vld [vmem:[%s165 + $0x1] sm:$0x1]
      %v202 = vld [vmem:[%s165 + $0x11] sm:$0x1]
      %v203 = vld [vmem:[%s165 + $0x21] sm:$0x1]
      %v204 = vld [vmem:[%s165 + $0x31] sm:$0x1]
      %v209 = vrot.slane %v202, 7
      %v210 = vsel %vm182, %v209, %v201
      %v211 = vsel %vm184, %v209, %v210
      %v212 = vrot.slane %v203, 6
      %v213 = vsel %vm187, %v212, %v211
      %v214 = vsel %vm189, %v212, %v213
      %v215 = vrot.slane %v204, 5
      %v216 = vsel %vm192, %v215, %v214
      %v217 = vsel %vm194, %v215, %v216
      %218 = vrot.lane.b32.xlu0 %v217, 37
      %v219 = vpop.permute.xlu0 %218
      %vm221 = vcmask 429352
      %222 = vst.msk [vmem:[#allocation2] sm:$0xf] %vm221, %v219
      %v223 = vld [vmem:[%s165 + $0x2] sm:$0x1]
      %v224 = vld [vmem:[%s165 + $0x12] sm:$0x1]
      %v225 = vld [vmem:[%s165 + $0x22] sm:$0x1]
      %v226 = vld [vmem:[%s165 + $0x32] sm:$0x1]
      %v231 = vrot.slane %v224, 7
      %v232 = vsel %vm182, %v231, %v223
      %v233 = vsel %vm184, %v231, %v232
      %v234 = vrot.slane %v225, 6
      %v235 = vsel %vm187, %v234, %v233
      %v236 = vsel %vm189, %v234, %v235
      %v237 = vrot.slane %v226, 5
      %v238 = vsel %vm192, %v237, %v236
      %v239 = vsel %vm194, %v237, %v238
      %240 = vrot.lane.b32.xlu0 %v239, 55
      %v241 = vpop.permute.xlu0 %240
      %vm243 = vcmask 576952
      %244 = vst.msk [vmem:[#allocation2] sm:$0xf] %vm243, %v241
      %v245 = vld [vmem:[%s165 + $0x3] sm:$0x1]
      %v246 = vld [vmem:[%s165 + $0x13] sm:$0x1]
      %v247 = vld [vmem:[%s165 + $0x23] sm:$0x1]
      %v248 = vld [vmem:[%s165 + $0x33] sm:$0x1]
      %v253 = vrot.slane %v246, 7
      %v254 = vsel %vm182, %v253, %v245
      %v255 = vsel %vm184, %v253, %v254
      %v256 = vrot.slane %v247, 6
      %v257 = vsel %vm187, %v256, %v255
      %v258 = vsel %vm189, %v256, %v257
      %v259 = vrot.slane %v248, 5
      %v260 = vsel %vm192, %v259, %v258
      %v261 = vsel %vm194, %v259, %v260
      %262 = vrot.lane.b32.xlu0 %v261, 73
      %v263 = vpop.permute.xlu0 %262
      %vm265 = vcmask 724552
      %266 = vst.msk [vmem:[#allocation2] sm:$0xf] %vm265, %v263
      %v267 = vld [vmem:[%s165 + $0x4] sm:$0x1]
      %v268 = vld [vmem:[%s165 + $0x14] sm:$0x1]
      %v269 = vld [vmem:[%s165 + $0x24] sm:$0x1]
      %v270 = vld [vmem:[%s165 + $0x34] sm:$0x1]
      %v275 = vrot.slane %v268, 7
      %v276 = vsel %vm182, %v275, %v267
      %v277 = vsel %vm184, %v275, %v276
      %v278 = vrot.slane %v269, 6
      %v279 = vsel %vm187, %v278, %v277
      %v280 = vsel %vm189, %v278, %v279
      %v281 = vrot.slane %v270, 5
      %v282 = vsel %vm192, %v281, %v280
      %v283 = vsel %vm194, %v281, %v282
      %284 = vrot.lane.b32.xlu0 %v283, 91
      %v285 = vpop.permute.xlu0 %284
      %vm287 = vcmask 872152
      %288 = vst.msk [vmem:[#allocation2] sm:$0xf] %vm287, %v285
      %v289 = vld [vmem:[%s165 + $0x5] sm:$0x1]
      %v290 = vld [vmem:[%s165 + $0x15] sm:$0x1]
      %v291 = vld [vmem:[%s165 + $0x25] sm:$0x1]
      %v292 = vld [vmem:[%s165 + $0x35] sm:$0x1]
      %v297 = vrot.slane %v290, 7
      %v298 = vsel %vm182, %v297, %v289
      %v299 = vsel %vm184, %v297, %v298
      %v300 = vrot.slane %v291, 6
      %v301 = vsel %vm187, %v300, %v299
      %v302 = vsel %vm189, %v300, %v301
      %v303 = vrot.slane %v292, 5
      %v304 = vsel %vm192, %v303, %v302
      %v305 = vsel %vm194, %v303, %v304
      %306 = vrot.lane.b32.xlu0 %v305, 109
      %v307 = vpop.permute.xlu0 %306
      %vm309 = vcmask 1019752
      %310 = vst.msk [vmem:[#allocation2] sm:$0xf] %vm309, %v307
      %v311 = vld [vmem:[%s165 + $0x6] sm:$0x1]
      %v312 = vld [vmem:[%s165 + $0x16] sm:$0x1]
      %v313 = vld [vmem:[%s165 + $0x26] sm:$0x1]
      %v314 = vld [vmem:[%s165 + $0x36] sm:$0x1]
      %v319 = vrot.slane %v312, 7
      %v320 = vsel %vm182, %v319, %v311
      %v321 = vsel %vm184, %v319, %v320
      %v322 = vrot.slane %v313, 6
      %v323 = vsel %vm187, %v322, %v321
      %v324 = vsel %vm189, %v322, %v323
      %v325 = vrot.slane %v314, 5
      %v326 = vsel %vm192, %v325, %v324
      %v327 = vsel %vm194, %v325, %v326
      %328 = vrot.lane.b32.xlu0 %v327, 127
      %v329 = vpop.permute.xlu0 %328
      %v330 = vrot.slane %v329, 4
      %vm331 = vcmask 1039360
      %v332 = vsel %vm331, %v330, %v329
      %vm334 = vcmask 1044472
      %vm335 = vcmask 121860
      %vm336 = vmor %vm335, %vm334
      %337 = vst.msk [vmem:[#allocation2] sm:$0xff] %vm336, %v332
      %v338 = vld [vmem:[%s165 + $0x7] sm:$0x1]
      %v339 = vld [vmem:[%s165 + $0x17] sm:$0x1]
      %v340 = vld [vmem:[%s165 + $0x27] sm:$0x1]
      %v341 = vld [vmem:[%s165 + $0x37] sm:$0x1]
      %v346 = vrot.slane %v339, 7
      %v347 = vsel %vm182, %v346, %v338
      %v348 = vsel %vm184, %v346, %v347
      %v349 = vrot.slane %v340, 6
      %v350 = vsel %vm187, %v349, %v348
      %v351 = vsel %vm189, %v349, %v350
      %v352 = vrot.slane %v341, 5
      %v353 = vsel %vm192, %v352, %v351
      %v354 = vsel %vm194, %v352, %v353
      %355 = vrot.lane.b32.xlu0 %v354, 17
      %v356 = vpop.permute.xlu0 %355
      %vm358 = vcmask 265352
      %359 = vst.msk [vmem:[#allocation2 + $0x4] sm:$0xf] %vm358, %v356
      %v360 = vld [vmem:[%s165 + $0x8] sm:$0x1]
      %v361 = vld [vmem:[%s165 + $0x18] sm:$0x1]
      %v362 = vld [vmem:[%s165 + $0x28] sm:$0x1]
      %v363 = vld [vmem:[%s165 + $0x38] sm:$0x1]
      %v368 = vrot.slane %v361, 7
      %v369 = vsel %vm182, %v368, %v360
      %v370 = vsel %vm184, %v368, %v369
      %v371 = vrot.slane %v362, 6
      %v372 = vsel %vm187, %v371, %v370
      %v373 = vsel %vm189, %v371, %v372
      %v374 = vrot.slane %v363, 5
      %v375 = vsel %vm192, %v374, %v373
      %v376 = vsel %vm194, %v374, %v375
      %377 = vrot.lane.b32.xlu0 %v376, 35
      %v378 = vpop.permute.xlu0 %377
      %vm380 = vcmask 412952
      %381 = vst.msk [vmem:[#allocation2 + $0x4] sm:$0xf] %vm380, %v378
      %v382 = vld [vmem:[%s165 + $0x9] sm:$0x1]
      %v383 = vld [vmem:[%s165 + $0x19] sm:$0x1]
      %v384 = vld [vmem:[%s165 + $0x29] sm:$0x1]
      %v385 = vld [vmem:[%s165 + $0x39] sm:$0x1]
      %v390 = vrot.slane %v383, 7
      %v391 = vsel %vm182, %v390, %v382
      %v392 = vsel %vm184, %v390, %v391
      %v393 = vrot.slane %v384, 6
      %v394 = vsel %vm187, %v393, %v392
      %v395 = vsel %vm189, %v393, %v394
      %v396 = vrot.slane %v385, 5
      %v397 = vsel %vm192, %v396, %v395
      %v398 = vsel %vm194, %v396, %v397
      %399 = vrot.lane.b32.xlu0 %v398, 53
      %v400 = vpop.permute.xlu0 %399
      %vm402 = vcmask 560552
      %403 = vst.msk [vmem:[#allocation2 + $0x4] sm:$0xf] %vm402, %v400
      %v404 = vld [vmem:[%s165 + $0xa] sm:$0x1]
      %v405 = vld [vmem:[%s165 + $0x1a] sm:$0x1]
      %v406 = vld [vmem:[%s165 + $0x2a] sm:$0x1]
      %v407 = vld [vmem:[%s165 + $0x3a] sm:$0x1]
      %v412 = vrot.slane %v405, 7
      %v413 = vsel %vm182, %v412, %v404
      %v414 = vsel %vm184, %v412, %v413
      %v415 = vrot.slane %v406, 6
      %v416 = vsel %vm187, %v415, %v414
      %v417 = vsel %vm189, %v415, %v416
      %v418 = vrot.slane %v407, 5
      %v419 = vsel %vm192, %v418, %v417
      %v420 = vsel %vm194, %v418, %v419
      %421 = vrot.lane.b32.xlu0 %v420, 71
      %v422 = vpop.permute.xlu0 %421
      %vm424 = vcmask 708152
      %425 = vst.msk [vmem:[#allocation2 + $0x4] sm:$0xf] %vm424, %v422
      %v426 = vld [vmem:[%s165 + $0xb] sm:$0x1]
      %v427 = vld [vmem:[%s165 + $0x1b] sm:$0x1]
      %v428 = vld [vmem:[%s165 + $0x2b] sm:$0x1]
      %v429 = vld [vmem:[%s165 + $0x3b] sm:$0x1]
      %v434 = vrot.slane %v427, 7
      %v435 = vsel %vm182, %v434, %v426
      %v436 = vsel %vm184, %v434, %v435
      %v437 = vrot.slane %v428, 6
      %v438 = vsel %vm187, %v437, %v436
      %v439 = vsel %vm189, %v437, %v438
      %v440 = vrot.slane %v429, 5
      %v441 = vsel %vm192, %v440, %v439
      %v442 = vsel %vm194, %v440, %v441
      %443 = vrot.lane.b32.xlu0 %v442, 89
      %v444 = vpop.permute.xlu0 %443
      %vm446 = vcmask 855752
      %447 = vst.msk [vmem:[#allocation2 + $0x4] sm:$0xf] %vm446, %v444
      %v448 = vld [vmem:[%s165 + $0xc] sm:$0x1]
      %v449 = vld [vmem:[%s165 + $0x1c] sm:$0x1]
      %v450 = vld [vmem:[%s165 + $0x2c] sm:$0x1]
      %v451 = vld [vmem:[%s165 + $0x3c] sm:$0x1]
      %v456 = vrot.slane %v449, 7
      %v457 = vsel %vm182, %v456, %v448
      %v458 = vsel %vm184, %v456, %v457
      %v459 = vrot.slane %v450, 6
      %v460 = vsel %vm187, %v459, %v458
      %v461 = vsel %vm189, %v459, %v460
      %v462 = vrot.slane %v451, 5
      %v463 = vsel %vm192, %v462, %v461
      %v464 = vsel %vm194, %v462, %v463
      %465 = vrot.lane.b32.xlu0 %v464, 107
      %v466 = vpop.permute.xlu0 %465
      %vm468 = vcmask 1003352
      %469 = vst.msk [vmem:[#allocation2 + $0x4] sm:$0xf] %vm468, %v466
      %v470 = vld [vmem:[%s165 + $0xd] sm:$0x1]
      %v471 = vld [vmem:[%s165 + $0x1d] sm:$0x1]
      %v472 = vld [vmem:[%s165 + $0x2d] sm:$0x1]
      %v473 = vld [vmem:[%s165 + $0x3d] sm:$0x1]
      %v478 = vrot.slane %v471, 7
      %v479 = vsel %vm182, %v478, %v470
      %v480 = vsel %vm184, %v478, %v479
      %v481 = vrot.slane %v472, 6
      %v482 = vsel %vm187, %v481, %v480
      %v483 = vsel %vm189, %v481, %v482
      %v484 = vrot.slane %v473, 5
      %v485 = vsel %vm192, %v484, %v483
      %v486 = vsel %vm194, %v484, %v485
      %487 = vrot.lane.b32.xlu0 %v486, 125
      %v488 = vpop.permute.xlu0 %487
      %v489 = vrot.slane %v488, 4
      %vm490 = vcmask 1022976
      %v491 = vsel %vm490, %v489, %v488
      %vm493 = vcmask 1044456
      %vm494 = vcmask 105476
      %vm495 = vmor %vm494, %vm493
      %496 = vst.msk [vmem:[#allocation2 + $0x4] sm:$0xff] %vm495, %v491
      %v497 = vld [vmem:[%s165 + $0xe] sm:$0x1]
      %v498 = vld [vmem:[%s165 + $0x1e] sm:$0x1]
      %v499 = vld [vmem:[%s165 + $0x2e] sm:$0x1]
      %v500 = vld [vmem:[%s165 + $0x3e] sm:$0x1]
      %v505 = vrot.slane %v498, 7
      %v506 = vsel %vm182, %v505, %v497
      %v507 = vsel %vm184, %v505, %v506
      %v508 = vrot.slane %v499, 6
      %v509 = vsel %vm187, %v508, %v507
      %v510 = vsel %vm189, %v508, %v509
      %v511 = vrot.slane %v500, 5
      %v512 = vsel %vm192, %v511, %v510
      %v513 = vsel %vm194, %v511, %v512
      %514 = vrot.lane.b32.xlu0 %v513, 15
      %v515 = vpop.permute.xlu0 %514
      %vm517 = vcmask 248952
      %518 = vst.msk [vmem:[#allocation2 + $0x8] sm:$0xf] %vm517, %v515
      %v519 = vld [vmem:[%s165 + $0xf] sm:$0x1]
      %v520 = vld [vmem:[%s165 + $0x1f] sm:$0x1]
      %v521 = vld [vmem:[%s165 + $0x2f] sm:$0x1]
      %v522 = vld [vmem:[%s165 + $0x3f] sm:$0x1]
      %v527 = vrot.slane %v520, 7
      %v528 = vsel %vm182, %v527, %v519
      %v529 = vsel %vm184, %v527, %v528
      %v530 = vrot.slane %v521, 6
      %v531 = vsel %vm187, %v530, %v529
      %v532 = vsel %vm189, %v530, %v531
      %v533 = vrot.slane %v522, 5
      %v534 = vsel %vm192, %v533, %v532
      %v535 = vsel %vm194, %v533, %v534
      %536 = vrot.lane.b32.xlu0 %v535, 33
      %v537 = vpop.permute.xlu0 %536
      %vm539 = vcmask 396552
      %540 = vst.msk [vmem:[#allocation2 + $0x8] sm:$0xf] %vm539, %v537
      %v541 = vld [vmem:[#allocation2] sm:$0xff]
      %v542 = vld [vmem:[#allocation2 + $0x8] sm:$0xf]
      %v544 = vcombine.high %v541, %v541
      %546 = vst [vmem:[#allocation3] sm:$0xf] %v541
      %547 = vst [vmem:[#allocation3 + $0x8] sm:$0xf] %v544
      %548 = vst [vmem:[#allocation3 + $0x10] sm:$0xf] %v542
      %v549 = vld [vmem:[#allocation2] sm:$0xff]
      %v550 = vld [vmem:[#allocation2 + $0x8] sm:$0xff]
      %v553 = vcombine.low %v549, %v549
      %v554 = vcombine.low %v550, %v550
      %555 = vrot.lane.b32.xlu0 %v553, 127
      %v556 = vpop.permute.xlu0 %555
      %557 = vrot.lane.b32.xlu0 %v549, 127
      %v558 = vpop.permute.xlu0 %557
      %559 = vrot.lane.b32.xlu0 %v554, 127
      %v560 = vpop.permute.xlu0 %559
      %561 = vrot.lane.b32.xlu0 %v550, 127
      %v562 = vpop.permute.xlu0 %561
      %v563 = vsel %vm331, %v556, %v558
      %v564 = vsel %vm331, %v558, %v560
      %v565 = vsel %vm331, %v560, %v562
      %569 = vst [vmem:[#allocation3] sm:$0xf0] %v563
      %570 = vst [vmem:[#allocation3 + $0x8] sm:$0xf0] %v564
      %571 = vst [vmem:[#allocation3 + $0x10] sm:$0xf0] %v565
      %v572 = vld [vmem:[#allocation2] sm:$0xff]
      %v573 = vld [vmem:[#allocation2 + $0x8] sm:$0xff]
      %v576 = vcombine.high %v572, %v572
      %v577 = vcombine.high %v573, %v573
      %578 = vrot.lane.b32.xlu0 %v572, 126
      %v579 = vpop.permute.xlu0 %578
      %580 = vrot.lane.b32.xlu0 %v576, 126
      %v581 = vpop.permute.xlu0 %580
      %582 = vrot.lane.b32.xlu0 %v573, 126
      %v583 = vpop.permute.xlu0 %582
      %584 = vrot.lane.b32.xlu0 %v577, 126
      %v585 = vpop.permute.xlu0 %584
      %vm586 = vcmask 1031168
      %v587 = vsel %vm586, %v579, %v581
      %v588 = vsel %vm586, %v581, %v583
      %v589 = vsel %vm586, %v583, %v585
      %593 = vst [vmem:[#allocation3 + $0x18] sm:$0xf] %v587
      %594 = vst [vmem:[#allocation3 + $0x20] sm:$0xf] %v588
      %595 = vst [vmem:[#allocation3 + $0x28] sm:$0xf] %v589
      %v596 = vld [vmem:[#allocation2] sm:$0xff]
      %v597 = vld [vmem:[#allocation2 + $0x8] sm:$0xff]
      %v600 = vcombine.low %v596, %v596
      %v601 = vcombine.low %v597, %v597
      %602 = vrot.lane.b32.xlu0 %v600, 110
      %v603 = vpop.permute.xlu0 %602
      %604 = vrot.lane.b32.xlu0 %v596, 110
      %v605 = vpop.permute.xlu0 %604
      %606 = vrot.lane.b32.xlu0 %v601, 110
      %v607 = vpop.permute.xlu0 %606
      %608 = vrot.lane.b32.xlu0 %v597, 110
      %v609 = vpop.permute.xlu0 %608
      %vm610 = vcmask 900096
      %v611 = vsel %vm610, %v603, %v605
      %v612 = vsel %vm610, %v605, %v607
      %v613 = vsel %vm610, %v607, %v609
      %617 = vst [vmem:[#allocation3 + $0x18] sm:$0xf0] %v611
      %618 = vst [vmem:[#allocation3 + $0x20] sm:$0xf0] %v612
      %619 = vst [vmem:[#allocation3 + $0x28] sm:$0xf0] %v613
      %v620 = vld [vmem:[#allocation2] sm:$0xff]
      %v621 = vld [vmem:[#allocation2 + $0x8] sm:$0xff]
      %v624 = vcombine.high %v620, %v620
      %v625 = vcombine.high %v621, %v621
      %626 = vrot.lane.b32.xlu0 %v620, 109
      %v627 = vpop.permute.xlu0 %626
      %628 = vrot.lane.b32.xlu0 %v624, 109
      %v629 = vpop.permute.xlu0 %628
      %630 = vrot.lane.b32.xlu0 %v621, 109
      %v631 = vpop.permute.xlu0 %630
      %632 = vrot.lane.b32.xlu0 %v625, 109
      %v633 = vpop.permute.xlu0 %632
      %vm634 = vcmask 891904
      %v635 = vsel %vm634, %v627, %v629
      %v636 = vsel %vm634, %v629, %v631
      %v637 = vsel %vm634, %v631, %v633
      %641 = vst [vmem:[#allocation3 + $0x30] sm:$0xf] %v635
      %642 = vst [vmem:[#allocation3 + $0x38] sm:$0xf] %v636
      %643 = vst [vmem:[#allocation3 + $0x40] sm:$0xf] %v637
      %v644 = vld [vmem:[#allocation2] sm:$0xff]
      %v645 = vld [vmem:[#allocation2 + $0x8] sm:$0xff]
      %v648 = vcombine.low %v644, %v644
      %v649 = vcombine.low %v645, %v645
      %650 = vrot.lane.b32.xlu0 %v648, 108
      %v651 = vpop.permute.xlu0 %650
      %652 = vrot.lane.b32.xlu0 %v644, 108
      %v653 = vpop.permute.xlu0 %652
      %654 = vrot.lane.b32.xlu0 %v649, 108
      %v655 = vpop.permute.xlu0 %654
      %656 = vrot.lane.b32.xlu0 %v645, 108
      %v657 = vpop.permute.xlu0 %656
      %vm658 = vcmask 883712
      %v659 = vsel %vm658, %v651, %v653
      %v660 = vsel %vm658, %v653, %v655
      %v661 = vsel %vm658, %v655, %v657
      %665 = vst [vmem:[#allocation3 + $0x30] sm:$0xf0] %v659
      %666 = vst [vmem:[#allocation3 + $0x38] sm:$0xf0] %v660
      %667 = vst [vmem:[#allocation3 + $0x40] sm:$0xf0] %v661
      %v668 = vld [vmem:[#allocation2] sm:$0xff]
      %v669 = vld [vmem:[#allocation2 + $0x8] sm:$0xff]
      %v672 = vcombine.high %v668, %v668
      %v673 = vcombine.high %v669, %v669
      %674 = vrot.lane.b32.xlu0 %v668, 92
      %v675 = vpop.permute.xlu0 %674
      %676 = vrot.lane.b32.xlu0 %v672, 92
      %v677 = vpop.permute.xlu0 %676
      %678 = vrot.lane.b32.xlu0 %v669, 92
      %v679 = vpop.permute.xlu0 %678
      %680 = vrot.lane.b32.xlu0 %v673, 92
      %v681 = vpop.permute.xlu0 %680
      %vm682 = vcmask 752640
      %v683 = vsel %vm682, %v675, %v677
      %v684 = vsel %vm682, %v677, %v679
      %v685 = vsel %vm682, %v679, %v681
      %689 = vst [vmem:[#allocation3 + $0x48] sm:$0xf] %v683
      %690 = vst [vmem:[#allocation3 + $0x50] sm:$0xf] %v684
      %691 = vst [vmem:[#allocation3 + $0x58] sm:$0xf] %v685
      %v692 = vld [vmem:[#allocation2] sm:$0xff]
      %v693 = vld [vmem:[#allocation2 + $0x8] sm:$0xff]
      %v696 = vcombine.low %v692, %v692
      %v697 = vcombine.low %v693, %v693
      %698 = vrot.lane.b32.xlu0 %v696, 91
      %v699 = vpop.permute.xlu0 %698
      %700 = vrot.lane.b32.xlu0 %v692, 91
      %v701 = vpop.permute.xlu0 %700
      %702 = vrot.lane.b32.xlu0 %v697, 91
      %v703 = vpop.permute.xlu0 %702
      %704 = vrot.lane.b32.xlu0 %v693, 91
      %v705 = vpop.permute.xlu0 %704
      %vm706 = vcmask 744448
      %v707 = vsel %vm706, %v699, %v701
      %v708 = vsel %vm706, %v701, %v703
      %v709 = vsel %vm706, %v703, %v705
      %713 = vst [vmem:[#allocation3 + $0x48] sm:$0xf0] %v707
      %714 = vst [vmem:[#allocation3 + $0x50] sm:$0xf0] %v708
      %715 = vst [vmem:[#allocation3 + $0x58] sm:$0xf0] %v709
      %v716 = vld [vmem:[#allocation2] sm:$0xff]
      %v717 = vld [vmem:[#allocation2 + $0x8] sm:$0xff]
      %v720 = vcombine.high %v716, %v716
      %v721 = vcombine.high %v717, %v717
      %722 = vrot.lane.b32.xlu0 %v716, 90
      %v723 = vpop.permute.xlu0 %722
      %724 = vrot.lane.b32.xlu0 %v720, 90
      %v725 = vpop.permute.xlu0 %724
      %726 = vrot.lane.b32.xlu0 %v717, 90
      %v727 = vpop.permute.xlu0 %726
      %728 = vrot.lane.b32.xlu0 %v721, 90
      %v729 = vpop.permute.xlu0 %728
      %vm730 = vcmask 736256
      %v731 = vsel %vm730, %v723, %v725
      %v732 = vsel %vm730, %v725, %v727
      %v733 = vsel %vm730, %v727, %v729
      %737 = vst [vmem:[#allocation3 + $0x60] sm:$0xf] %v731
      %738 = vst [vmem:[#allocation3 + $0x68] sm:$0xf] %v732
      %739 = vst [vmem:[#allocation3 + $0x70] sm:$0xf] %v733
      %v740 = vld [vmem:[%s1] sm:$0xff]
      %v741 = vld [vmem:[%s1 + $0x8] sm:$0xff]
      %v742 = vld [vmem:[#allocation3] sm:$0xff]
      %v743 = vld [vmem:[#allocation3 + $0x8] sm:$0xff]
      %v744 = vld [vmem:[#allocation3 + $0x10] sm:$0xff]
      %v745 = vld [vmem:[#allocation3 + $0x18] sm:$0xff]
      %v746 = vld [vmem:[#allocation3 + $0x20] sm:$0xff]
      %v747 = vld [vmem:[#allocation3 + $0x28] sm:$0xff]
      %v748 = vld [vmem:[#allocation3 + $0x30] sm:$0xff]
      %v749 = vld [vmem:[#allocation3 + $0x38] sm:$0xff]
      %v750 = vld [vmem:[#allocation3 + $0x40] sm:$0xff]
      %v751 = vld [vmem:[#allocation3 + $0x48] sm:$0xff]
      %v752 = vld [vmem:[#allocation3 + $0x50] sm:$0xff]
      %v753 = vld [vmem:[#allocation3 + $0x58] sm:$0xff]
      %v754 = vld [vmem:[#allocation3 + $0x60] sm:$0xf]
      %v755 = vld [vmem:[#allocation3 + $0x68] sm:$0xf]
      %v756 = vld [vmem:[#allocation3 + $0x70] sm:$0xf]
      %v757 = vld [vmem:[%s2] sm:$0xff]
      %v758 = vld [vmem:[%s2 + $0x8] sm:$0xff]
      %760 = vset.pattern.permute.xlu0 0
      %761 = vperm.xlu0 %760, %v757
      %v762 = vpop.permute.xlu0 %761
      %765 = vset.pattern.permute.xlu0 0
      %766 = vperm.xlu0 %765, %v758
      %v767 = vpop.permute.xlu0 %766
      %vm769 = vcmask 293888
      %v771 = vsel %vm769, %v740, 0
      %v774 = vsel %vm769, %v741, 0
      %vm776 = vcmask 1043456
      %v778 = vsel %vm776, %v754, 0
      %v781 = vsel %vm776, %v755, 0
      %v784 = vsel %vm776, %v756, 0
      %786 = vmatprep.subr.mxu0 %v743
      %787 = vmatpush1.msra.mxu0 %v742
      %788 = vmatprep.subr.mxu0 %v746
      %789 = vmatpush1.msra.mxu0 %v745
      %790 = vmatprep.subr.mxu0 %v749
      %791 = vmatpush1.msra.mxu0 %v748
      %792 = vmatprep.subr.mxu0 %v752
      %793 = vmatpush1.msra.mxu0 %v751
      %794 = vmatprep.subr.mxu0 %v781
      %795 = vmatpush1.msra.mxu0 %v778
      %796 = vmatprep.subr.mxu0 0.0
      %797 = vmatpush1.msra.mxu0 0.0
      %798 = vmatprep.subr.mxu0 0.0
      %799 = vmatpush1.msra.mxu0 0.0
      %800 = vmatprep.subr.mxu0 0.0
      %801 = vmatpush1.msra.mxu0 0.0
      %802 = vmatprep.subr.mxu0 0.0
      %803 = vmatpush1.msra.mxu0 0.0
      %804 = vmatprep.subr.mxu0 0.0
      %805 = vmatpush1.msra.mxu0 0.0
      %806 = vmatprep.subr.mxu0 0.0
      %807 = vmatpush1.msra.mxu0 0.0
      %808 = vmatprep.subr.mxu0 0.0
      %809 = vmatpush1.msra.mxu0 0.0
      %810 = vmatprep.subr.mxu0 0.0
      %811 = vmatpush1.msra.mxu0 0.0
      %812 = vmatprep.subr.mxu0 0.0
      %813 = vmatpush1.msra.mxu0 0.0
      %814 = vmatprep.subr.mxu0 0.0
      %815 = vmatpush1.msra.mxu0 0.0
      %816 = vmatprep.subr.mxu0 0.0
      %817 = vmatpush1.msra.mxu0 0.0
      %818 = vmatprep.subr.mxu0 0.0
      %819 = vmatpush1.msra.mxu0 0.0
      %820 = vmatprep.subr.mxu0 0.0
      %821 = vmatpush1.msra.mxu0 0.0
      %822 = vmatprep.subr.mxu0 0.0
      %823 = vmatpush1.msra.mxu0 0.0
      %824 = vmatprep.subr.mxu0 0.0
      %825 = vmatpush1.msra.mxu0 0.0
      %826 = vmatprep.subr.mxu0 0.0
      %827 = vmatpush1.msra.mxu0 0.0
      %828 = vmatprep.subr.mxu0 0.0
      %829 = vmatpush1.msra.mxu0 0.0
      %830 = vmatprep.subr.mxu0 0.0
      %831 = vmatpush1.msra.mxu0 0.0
      %832 = vmatprep.subr.mxu0 0.0
      %833 = vmatpush1.msra.mxu0 0.0
      %834 = vmatprep.subr.mxu0 0.0
      %835 = vmatpush1.msra.mxu0 0.0
      %836 = vmatprep.subr.mxu0 0.0
      %837 = vmatpush1.msra.mxu0 0.0
      %838 = vmatprep.subr.mxu0 0.0
      %839 = vmatpush1.msra.mxu0 0.0
      %840 = vmatprep.subr.mxu0 0.0
      %841 = vmatpush1.msra.mxu0 0.0
      %842 = vmatprep.subr.mxu0 0.0
      %843 = vmatpush1.msra.mxu0 0.0
      %844 = vmatprep.subr.mxu0 0.0
      %845 = vmatpush1.msra.mxu0 0.0
      %846 = vmatprep.subr.mxu0 0.0
      %847 = vmatpush1.msra.mxu0 0.0
      %848 = vmatprep.subr.mxu0 0.0
      %849 = vmatpush1.msra.mxu0 0.0
      %850 = vmatprep.mubr.f32.mxu0 0.0
      %851 = vmatmul.mubr.f32.gmra.mrb[0].mxu0 %v771
      %v852 = vpop.f32.mrb[0].mxu0
      %v853 = vadd.f32 %v762, %v852
      %v854 = vpop.f32.mrb[0].mxu0
      %v855 = vadd.f32 %v762, %v854
      %856 = vmatprep.mubr.f32.mxu0 0.0
      %857 = vmatmul.mubr.f32.gmra.mrb[0].mxu0 %v774
      %v858 = vpop.f32.mrb[0].mxu0
      %v859 = vadd.f32 %v767, %v858
      %v860 = vpop.f32.mrb[0].mxu0
      %v861 = vadd.f32 %v767, %v860
      %862 = vdwg.mxu0
      %863 = vmatprep.subr.mxu0 0.0
      %864 = vmatpush1.msra.mxu0 %v744
      %865 = vmatprep.subr.mxu0 0.0
      %866 = vmatpush1.msra.mxu0 %v747
      %867 = vmatprep.subr.mxu0 0.0
      %868 = vmatpush1.msra.mxu0 %v750
      %869 = vmatprep.subr.mxu0 0.0
      %870 = vmatpush1.msra.mxu0 %v753
      %871 = vmatprep.subr.mxu0 0.0
      %872 = vmatpush1.msra.mxu0 %v784
      %873 = vmatprep.subr.mxu0 0.0
      %874 = vmatpush1.msra.mxu0 0.0
      %875 = vmatprep.subr.mxu0 0.0
      %876 = vmatpush1.msra.mxu0 0.0
      %877 = vmatprep.subr.mxu0 0.0
      %878 = vmatpush1.msra.mxu0 0.0
      %879 = vmatprep.subr.mxu0 0.0
      %880 = vmatpush1.msra.mxu0 0.0
      %881 = vmatprep.subr.mxu0 0.0
      %882 = vmatpush1.msra.mxu0 0.0
      %883 = vmatprep.subr.mxu0 0.0
      %884 = vmatpush1.msra.mxu0 0.0
      %885 = vmatprep.subr.mxu0 0.0
      %886 = vmatpush1.msra.mxu0 0.0
      %887 = vmatprep.subr.mxu0 0.0
      %888 = vmatpush1.msra.mxu0 0.0
      %889 = vmatprep.subr.mxu0 0.0
      %890 = vmatpush1.msra.mxu0 0.0
      %891 = vmatprep.subr.mxu0 0.0
      %892 = vmatpush1.msra.mxu0 0.0
      %893 = vmatprep.subr.mxu0 0.0
      %894 = vmatpush1.msra.mxu0 0.0
      %895 = vmatprep.subr.mxu0 0.0
      %896 = vmatpush1.msra.mxu0 0.0
      %897 = vmatprep.subr.mxu0 0.0
      %898 = vmatpush1.msra.mxu0 0.0
      %899 = vmatprep.subr.mxu0 0.0
      %900 = vmatpush1.msra.mxu0 0.0
      %901 = vmatprep.subr.mxu0 0.0
      %902 = vmatpush1.msra.mxu0 0.0
      %903 = vmatprep.subr.mxu0 0.0
      %904 = vmatpush1.msra.mxu0 0.0
      %905 = vmatprep.subr.mxu0 0.0
      %906 = vmatpush1.msra.mxu0 0.0
      %907 = vmatprep.subr.mxu0 0.0
      %908 = vmatpush1.msra.mxu0 0.0
      %909 = vmatprep.subr.mxu0 0.0
      %910 = vmatpush1.msra.mxu0 0.0
      %911 = vmatprep.subr.mxu0 0.0
      %912 = vmatpush1.msra.mxu0 0.0
      %913 = vmatprep.subr.mxu0 0.0
      %914 = vmatpush1.msra.mxu0 0.0
      %915 = vmatprep.subr.mxu0 0.0
      %916 = vmatpush1.msra.mxu0 0.0
      %917 = vmatprep.subr.mxu0 0.0
      %918 = vmatpush1.msra.mxu0 0.0
      %919 = vmatprep.subr.mxu0 0.0
      %920 = vmatpush1.msra.mxu0 0.0
      %921 = vmatprep.subr.mxu0 0.0
      %922 = vmatpush1.msra.mxu0 0.0
      %923 = vmatprep.subr.mxu0 0.0
      %924 = vmatpush1.msra.mxu0 0.0
      %925 = vmatprep.subr.mxu0 0.0
      %926 = vmatpush1.msra.mxu0 0.0
      %927 = vmatprep.mubr.f32.mxu0 0.0
      %928 = vmatmul.mubr.f32.gmra.mrb[0].mxu0 %v771
      %v929 = vpop.f32.mrb[0].mxu0
      %v930 = vadd.f32 %v762, %v929
      %v931 = vpop.f32.mrb[0].mxu0
      %932 = vmatprep.mubr.f32.mxu0 0.0
      %933 = vmatmul.mubr.f32.gmra.mrb[0].mxu0 %v774
      %v934 = vpop.f32.mrb[0].mxu0
      %v935 = vadd.f32 %v767, %v934
      %v936 = vpop.f32.mrb[0].mxu0
      %937 = vdwg.mxu0
      %v938 = vmax.f32 %v853, 0.0
      %v939 = vmax.f32 %v855, 0.0
      %v940 = vmax.f32 %v930, 0.0
      %v941 = vmax.f32 %v859, 0.0
      %v942 = vmax.f32 %v861, 0.0
      %v943 = vmax.f32 %v935, 0.0
      %944 = vst [vmem:[%s170] sm:$0xff] %v938
      %945 = vst [vmem:[%s170 + $0x8] sm:$0xff] %v939
      %946 = vst [vmem:[%s170 + $0x10] sm:$0xff] %v940
      %947 = vst [vmem:[%s170 + $0x18] sm:$0xff] %v941
      %948 = vst [vmem:[%s170 + $0x20] sm:$0xff] %v942
      %949 = vst [vmem:[%s170 + $0x28] sm:$0xff] %v943
      %p950 = scmp.lt.s32.totalorder %s14, 1
      %s951 = scalar_select %p950, %s14, 1
      %s952 = smul.addr %s951, 6
      %s953 = smul.addr %s952, 8
      %s954 = scalar_lea.vmem %s3, %s953
      // Predicated region
      $region33: #{crelu_forward.1} parent=31 // pred_check
        %p955 = pneg %p100
      $region34: #{crelu_forward.1} parent=31 // pred_check_branch
        %957 = sbr.rel (%p955) target = $region36
      $region35: #{crelu_forward.1} parent=31 // pred_region
        _
      $region36: #{crelu_forward.1} parent=31 // pred_fallthru
        _
    $region32: #{crelu_forward.1} parent=5 // pred_fallthru
      _
    %p958 = scmp.le.s32.totalorder 2, %s9
    // Predicated region
    $region37: #{crelu_forward.1} parent=5 // pred_check
      %p959 = pneg %p958
    $region38: #{crelu_forward.1} parent=5 // pred_check_branch
      %961 = sbr.rel (%p959) target = $region40
    $region39: #{crelu_forward.1} parent=5 // pred_region
      %s962 = ssub.s32 %s9, 2
      // Predicated region
      $region41: #{crelu_forward.1} parent=39 // pred_check
        %p963 = pneg %p106
      $region42: #{crelu_forward.1} parent=39 // pred_check_branch
        %965 = sbr.rel (%p963) target = $region44
      $region43: #{crelu_forward.1} parent=39 // pred_region
        %p966 = scmp.lt.s32.totalorder %s15, 1
        %s967 = scalar_select %p966, %s15, 1
        %s968 = smul.addr %s967, 6
        %s969 = smul.addr %s968, 8
        %s970 = scalar_lea.vmem %s3, %s969
      $region44: #{crelu_forward.1} parent=39 // pred_fallthru
        _
    $region40: #{crelu_forward.1} parent=5 // pred_fallthru
      _
  $region6: #{crelu_forward.1} parent=0 // loop_footer
    %s13 = sadd.s32 1, %s9
  $region7: #{crelu_forward.1} parent=0 // loop_footer_branch
    %8 = sbr.rel target = $region3
  $region8: #{crelu_forward.1} parent=0 // loop_exit
    _

</llo_original>
